<compile_context>
chip_gen: v6e
topology: v6e:2x2x1
jax: 0.10.0
libtpu: 0.0.40
codegen_flags: <defaults>
</compile_context>

<pallas_src>
import jax
import jax.numpy as jnp
from jax.experimental import pallas as pl
from jax.experimental.pallas import tpu as pltpu

BN_EPS = 1e-5
H1, H2 = 128, 64

_VMEM_PIPELINE_BUDGET = 20 * 1024 * 1024   # per-tile pipeline budget (v7x-safe)
_VMEM_LIMIT_BYTES = 32 * 1024 * 1024       # scoped VMEM limit (safe on v5e/v6e/v7x)
_MAX_TILE_N = 8192


# ----------------------------------------------------------------------------
# Kernel
# ----------------------------------------------------------------------------
def _discriminator_kernel(x_ref, w1_ref, b1_ref, w2_ref, b2_ref, w3r_ref, o_ref):
    # x streams in as f32 and is cast to bf16 in VMEM (cheaper end-to-end than a
    # separate XLA convert pass over x in HBM).
    x = x_ref[...].astype(jnp.bfloat16)

    # Block 1: Linear(c_in, 128) -> ReLU    (BN1 is folded into W2'/b2')
    # NOTE: K=c_in / N=128 underfill the MXU, but the kernel is stream-bound, so
    # do NOT zero-pad K (that would 4x the x HBM bytes for no gain).
    h = jnp.dot(x, w1_ref[...], preferred_element_type=jnp.float32) + b1_ref[...]
    h = jnp.maximum(h, 0.0)

    # Block 2: Linear(128, 64) (BN1 folded) -> ReLU   (BN2 folded into w3/b3)
    h = jnp.dot(h.astype(w2_ref.dtype), w2_ref[...],
                preferred_element_type=jnp.float32) + b2_ref[...]
    h = jnp.maximum(h, 0.0)

    # Dropout (eval mode => identity), then Linear(64, 1) produced lane-dense:
    # (1, H2) . (tile_n, H2)^T -> (1, tile_n), so the writeback is full-lane,
    # unmasked stores instead of a 1-lane-wide masked column.
    out = jax.lax.dot_general(
        w3r_ref[...], h,
        dimension_numbers=(((1,), (1,)), ((), ())),
        preferred_element_type=jnp.float32)
    o_ref[...] = out.astype(o_ref.dtype)


# ----------------------------------------------------------------------------
# Parameter prep: fold BatchNorm (eval mode) into the following Linear, in f32.
# ----------------------------------------------------------------------------
def fold_params(params):
    s1 = params["g1"] * jax.lax.rsqrt(params["v1"] + BN_EPS)      # [1, H1]
    t1 = params["be1"] - params["m1"] * s1                        # [1, H1]
    s2 = params["g2"] * jax.lax.rsqrt(params["v2"] + BN_EPS)      # [1, H2]
    t2 = params["be2"] - params["m2"] * s2                        # [1, H2]

    w2f = params["w2"] * s1.reshape(-1, 1)                        # [H1, H2]
    b2f = params["b2"] + t1 @ params["w2"]                        # [1, H2]
    w3f = params["w3"] * s2.reshape(-1, 1)                        # [H2, 1]
    b3f = params["b3"] + t2 @ params["w3"]                        # [1, 1]

    return {
        "w1": params["w1"],          # [C_in, H1]  f32 (cast to bf16 at call time)
        "b1": params["b1"],          # [1, H1]     f32
        "w2": w2f,                   # [H1, H2]    f32 (cast to bf16 at call time)
        "b2": b2f,                   # [1, H2]     f32
        "w3_row": w3f.T,             # [1, H2]     f32 (lane-dense final projection)
        "b3": b3f,                   # [1, 1]      f32 (added in wrapper epilogue)
    }


# ----------------------------------------------------------------------------
# Tile-size selection from a VMEM pipeline budget (v7x's 64 MiB is the binder).
# ----------------------------------------------------------------------------
def _round_up(v, m):
    return ((v + m - 1) // m) * m


def _pick_tile_n(n, c_in):
    bytes_per_row = (2 * c_in * 4        # double-buffered f32 x stream
                     + c_in * 2          # bf16 cast of the x tile
                     + H1 * (4 + 2)      # h1 f32 + bf16 copy
                     + H2 * 4            # h2 f32
                     + 2 * 4)            # double-buffered lane-dense f32 output
    cap = _VMEM_PIPELINE_BUDGET // bytes_per_row
    cap = max(128, min(_MAX_TILE_N, (cap // 128) * 128))   # lane-dense out blocks
    n8 = _round_up(max(n, 1), 8)
    # If the whole (8-rounded) batch fits in one tile, use it (single block ==
    # full output dim); otherwise use the 128-aligned budget cap.
    return n8 if n8 < cap else cap


# ----------------------------------------------------------------------------
# Wrapper
# ----------------------------------------------------------------------------
def discriminator_forward(x, params, *, tile_n=None):
    """x: [N, C_in] float32. Returns [N, 1] float32 (eval-mode forward)."""
    N, c_in = x.shape
    folded = fold_params(params)

    if tile_n is None:
        tile_n = _pick_tile_n(N, c_in)
    # Lane-dense (1, tile_n) output blocks need tile_n % 128 == 0 unless a
    # single tile covers the whole batch.
    assert tile_n % 8 == 0 and (tile_n % 128 == 0 or tile_n >= N), tile_n

    n_tiles = pl.cdiv(N, tile_n)
    n_pad = n_tiles * tile_n

    w1 = folded["w1"].astype(jnp.bfloat16)
    w2 = folded["w2"].astype(jnp.bfloat16)

    const = lambda i: (0, 0)   # weights / biases: resident across grid steps

    flops = 2 * N * (c_in * H1 + H1 * H2 + H2)
    bytes_accessed = (N * c_in * 4 + N * 4            # x stream (f32) + output (f32)
                      + c_in * H1 * 2 + H1 * H2 * 2   # bf16 weights
                      + (H1 + H2 + H2) * 4)           # f32 biases / w3 row

    out_row = pl.pallas_call(
        _discriminator_kernel,
        out_shape=jax.ShapeDtypeStruct((1, n_pad), jnp.float32),
        grid=(n_tiles,),
        in_specs=[
            pl.BlockSpec((tile_n, c_in), lambda i: (i, 0)),   # x tile (f32 stream)
            pl.BlockSpec((c_in, H1), const),                  # W1 (bf16)
            pl.BlockSpec((1, H1), const),                     # b1
            pl.BlockSpec((H1, H2), const),                    # W2' (bf16, BN1 folded)
            pl.BlockSpec((1, H2), const),                     # b2'
            pl.BlockSpec((1, H2), const),                     # w3 row (BN2 folded)
        ],
        out_specs=pl.BlockSpec((1, tile_n), lambda i: (0, i)),  # lane-dense output
        compiler_params=pltpu.CompilerParams(
            # TODO(synk): on v7x (2 TCs) consider pltpu.CORE_PARALLEL on the batch
            # axis if plain "parallel" does not shard tiles across both cores.
            dimension_semantics=("parallel",),
            vmem_limit_bytes=_VMEM_LIMIT_BYTES),
        cost_estimate=pl.CostEstimate(
            flops=flops, transcendentals=0, bytes_accessed=bytes_accessed),
    )(x.astype(jnp.float32), w1, folded["b1"], w2, folded["b2"], folded["w3_row"])

    # b3 (with folded BN2 shift) is added here; fuses with the slice/reshape and
    # avoids a (1,1) VMEM block inside the kernel.
    return out_row.reshape(-1)[:N].reshape(N, 1) + folded["b3"]


# ----------------------------------------------------------------------------
# Deterministic parameter construction (stand-in for the trained module state).
# ----------------------------------------------------------------------------
def make_params(key, in_channels, out_channels=1):
    ks = jax.random.split(key, 8)

    def lin(k, fan_in, fan_out):
        return (jax.random.normal(k, (fan_in, fan_out), jnp.float32)
                * (1.0 / jnp.sqrt(fan_in)))

    return {
        "w1": lin(ks[0], in_channels, H1),
        "b1": jax.random.normal(ks[1], (1, H1), jnp.float32) * 0.01,
        "g1": jnp.ones((1, H1), jnp.float32),
        "be1": jnp.zeros((1, H1), jnp.float32),
        "m1": jax.random.normal(ks[2], (1, H1), jnp.float32) * 0.05,
        "v1": jnp.ones((1, H1), jnp.float32) * 0.9,
        "w2": lin(ks[3], H1, H2),
        "b2": jax.random.normal(ks[4], (1, H2), jnp.float32) * 0.01,
        "g2": jnp.ones((1, H2), jnp.float32),
        "be2": jnp.zeros((1, H2), jnp.float32),
        "m2": jax.random.normal(ks[5], (1, H2), jnp.float32) * 0.05,
        "v2": jnp.ones((1, H2), jnp.float32) * 1.1,
        "w3": lin(ks[6], H2, out_channels),
        "b3": jax.random.normal(ks[7], (1, out_channels), jnp.float32) * 0.01,
    }


# ----------------------------------------------------------------------------
# Pure-JAX references for correctness checking.
# ----------------------------------------------------------------------------
def reference_forward_f32(x, params):
    """Original eval-mode module semantics in f32 (Lin->ReLU->BN ×2, Dropout=id, Lin)."""
    h = jnp.maximum(x @ params["w1"] + params["b1"], 0.0)
    h = (h - params["m1"]) * jax.lax.rsqrt(params["v1"] + BN_EPS) * params["g1"] + params["be1"]
    h = jnp.maximum(h @ params["w2"] + params["b2"], 0.0)
    h = (h - params["m2"]) * jax.lax.rsqrt(params["v2"] + BN_EPS) * params["g2"] + params["be2"]
    return h @ params["w3"] + params["b3"]


def reference_forward_folded(x, folded, quantize):
    """Folded-BN path; optionally mirrors the kernel's bf16 quantization."""
    if quantize:
        x = x.astype(jnp.bfloat16).astype(jnp.float32)
        w1 = folded["w1"].astype(jnp.bfloat16).astype(jnp.float32)
        w2 = folded["w2"].astype(jnp.bfloat16).astype(jnp.float32)
    else:
        w1, w2 = folded["w1"], folded["w2"]
    h = jnp.maximum(x @ w1 + folded["b1"], 0.0)
    if quantize:
        h = h.astype(jnp.bfloat16).astype(jnp.float32)
    h = jnp.maximum(h @ w2 + folded["b2"], 0.0)
    return jnp.sum(h * folded["w3_row"], axis=-1, keepdims=True) + folded["b3"]


if __name__ == "__main__":
    key = jax.random.PRNGKey(0)
    k_x1, k_x2, k_p = jax.random.split(key, 3)

    C_IN = 32
    params = make_params(k_p, C_IN, out_channels=1)
    folded = fold_params(params)

    # 1) Tiny batch: single tile, auto tile size.
    N1 = 8
    x1 = jax.random.normal(k_x1, (N1, C_IN), jnp.float32)
    out1 = jax.block_until_ready(discriminator_forward(x1, params))
    assert out1.shape == (N1, 1)

    # 2) Multi-tile + ragged last block (tile_n=128, N=300 -> 3 tiles, last partial).
    N2 = 300
    x2 = jax.random.normal(k_x2, (N2, C_IN), jnp.float32)
    out2 = jax.block_until_ready(discriminator_forward(x2, params, tile_n=128))
    assert out2.shape == (N2, 1)

    for x, out in ((x1, out1), (x2, out2)):
        # BN-folding math (f32) matches the original eval-mode module exactly.
        ref_orig = reference_forward_f32(x, params)
        ref_fold = reference_forward_folded(x, folded, quantize=False)
        assert jnp.allclose(ref_fold, ref_orig, atol=1e-4, rtol=1e-4), "BN fold mismatch"

        # Kernel matches the bf16-quantized folded reference closely.
        ref_q = reference_forward_folded(x, folded, quantize=True)
        assert jnp.allclose(out, ref_q, atol=1e-2, rtol=1e-2), "kernel mismatch vs ref"

        # Loose check against full-precision original semantics (bf16 rounding).
        assert jnp.allclose(out, ref_orig, atol=5e-2, rtol=5e-2), "kernel far from f32 ref"

    print("KERNEL_OK")
</pallas_src>

<mosaic_0001>
module attributes {stable_mosaic.version = 11 : i64} {
  func.func @_discriminator_kernel(%arg0: i32, %arg1: memref<8x32xf32, #tpu.memory_space<vmem>>, %arg2: memref<32x128xbf16, #tpu.memory_space<vmem>>, %arg3: memref<1x128xf32, #tpu.memory_space<vmem>>, %arg4: memref<128x64xbf16, #tpu.memory_space<vmem>>, %arg5: memref<1x64xf32, #tpu.memory_space<vmem>>, %arg6: memref<1x64xf32, #tpu.memory_space<vmem>>, %arg7: memref<1x8xf32, #tpu.memory_space<vmem>>) attributes {dimension_semantics = [#tpu.dimension_semantics<parallel>], iteration_bounds = array<i64: 1>, scalar_prefetch = 0 : i64, scratch_operands = 0 : i64, tpu.core_type = #tpu.core_type<tc>, window_params = [{transform_indices = @transform_0, window_bounds = array<i64: 8, 32>}, {pipeline_mode = #tpu.pipeline_mode<synchronous>, transform_indices = @transform_1, window_bounds = array<i64: 32, 128>}, {pipeline_mode = #tpu.pipeline_mode<synchronous>, transform_indices = @transform_2, window_bounds = array<i64: 1, 128>}, {pipeline_mode = #tpu.pipeline_mode<synchronous>, transform_indices = @transform_3, window_bounds = array<i64: 128, 64>}, {pipeline_mode = #tpu.pipeline_mode<synchronous>, transform_indices = @transform_4, window_bounds = array<i64: 1, 64>}, {pipeline_mode = #tpu.pipeline_mode<synchronous>, transform_indices = @transform_5, window_bounds = array<i64: 1, 64>}, {transform_indices = @transform_6, window_bounds = array<i64: 1, 8>}]} {
    %c0 = arith.constant 0 : index
    %c0_0 = arith.constant 0 : index
    %0 = vector.load %arg1[%c0, %c0_0] : memref<8x32xf32, #tpu.memory_space<vmem>>, vector<8x32xf32>
    %1 = arith.truncf %0 : vector<8x32xf32> to vector<8x32xbf16>
    %c0_1 = arith.constant 0 : index
    %c0_2 = arith.constant 0 : index
    %2 = vector.load %arg2[%c0_1, %c0_2] : memref<32x128xbf16, #tpu.memory_space<vmem>>, vector<32x128xbf16>
    %cst = arith.constant dense<0.000000e+00> : vector<8x128xf32>
    %3 = tpu.matmul %1, %2, %cst {dimension_numbers = #tpu.dot_dimension_numbers<[1], [0], [0], [1], [0, 0, 1, 1], [], []>} : vector<8x32xbf16>, vector<32x128xbf16>, vector<8x128xf32> -> vector<8x128xf32>
    %c0_3 = arith.constant 0 : index
    %c0_4 = arith.constant 0 : index
    %4 = vector.load %arg3[%c0_3, %c0_4] : memref<1x128xf32, #tpu.memory_space<vmem>>, vector<1x128xf32>
    %5 = vector.broadcast %4 : vector<1x128xf32> to vector<8x128xf32>
    %6 = arith.addf %3, %5 : vector<8x128xf32>
    %cst_5 = arith.constant 0.000000e+00 : f32
    %7 = vector.broadcast %cst_5 : f32 to vector<8x128xf32>
    %8 = arith.maximumf %6, %7 : vector<8x128xf32>
    %9 = arith.truncf %8 : vector<8x128xf32> to vector<8x128xbf16>
    %c0_6 = arith.constant 0 : index
    %c0_7 = arith.constant 0 : index
    %10 = vector.load %arg4[%c0_6, %c0_7] : memref<128x64xbf16, #tpu.memory_space<vmem>>, vector<128x64xbf16>
    %cst_8 = arith.constant dense<0.000000e+00> : vector<8x64xf32>
    %11 = tpu.matmul %9, %10, %cst_8 {dimension_numbers = #tpu.dot_dimension_numbers<[1], [0], [0], [1], [0, 0, 1, 1], [], []>} : vector<8x128xbf16>, vector<128x64xbf16>, vector<8x64xf32> -> vector<8x64xf32>
    %c0_9 = arith.constant 0 : index
    %c0_10 = arith.constant 0 : index
    %12 = vector.load %arg5[%c0_9, %c0_10] : memref<1x64xf32, #tpu.memory_space<vmem>>, vector<1x64xf32>
    %13 = vector.broadcast %12 : vector<1x64xf32> to vector<8x64xf32>
    %14 = arith.addf %11, %13 : vector<8x64xf32>
    %cst_11 = arith.constant 0.000000e+00 : f32
    %15 = vector.broadcast %cst_11 : f32 to vector<8x64xf32>
    %16 = arith.maximumf %14, %15 : vector<8x64xf32>
    %c0_12 = arith.constant 0 : index
    %c0_13 = arith.constant 0 : index
    %17 = vector.load %arg6[%c0_12, %c0_13] : memref<1x64xf32, #tpu.memory_space<vmem>>, vector<1x64xf32>
    %cst_14 = arith.constant dense<0.000000e+00> : vector<1x8xf32>
    %18 = tpu.matmul %17, %16, %cst_14 {dimension_numbers = #tpu.dot_dimension_numbers<[1], [1], [0], [0], [0, 0, 1, 0], [], []>} : vector<1x64xf32>, vector<8x64xf32>, vector<1x8xf32> -> vector<1x8xf32>
    %c0_15 = arith.constant 0 : index
    %c0_16 = arith.constant 0 : index
    %19 = vector.load %arg7[%c0_15, %c0_16] : memref<1x8xf32, #tpu.memory_space<vmem>>, vector<1x8xf32>
    tpu.vector_store %arg7[%c0_15, %c0_16], %18 {strides = array<i32>} : memref<1x8xf32, #tpu.memory_space<vmem>>, vector<1x8xf32>,
    return
  }
  func.func @transform_0(%arg0: i32) -> (i32, i32) {
    %c0_i32 = arith.constant 0 : i32
    %c0_i32_0 = arith.constant 0 : i32
    return %arg0, %c0_i32 : i32, i32
  }
  func.func @transform_1(%arg0: i32) -> (i32, i32) {
    %c0_i32 = arith.constant 0 : i32
    %c0_i32_0 = arith.constant 0 : i32
    %c0_i32_1 = arith.constant 0 : i32
    return %c0_i32, %c0_i32_0 : i32, i32
  }
  func.func @transform_2(%arg0: i32) -> (i32, i32) {
    %c0_i32 = arith.constant 0 : i32
    %c0_i32_0 = arith.constant 0 : i32
    %c0_i32_1 = arith.constant 0 : i32
    return %c0_i32, %c0_i32_0 : i32, i32
  }
  func.func @transform_3(%arg0: i32) -> (i32, i32) {
    %c0_i32 = arith.constant 0 : i32
    %c0_i32_0 = arith.constant 0 : i32
    %c0_i32_1 = arith.constant 0 : i32
    return %c0_i32, %c0_i32_0 : i32, i32
  }
  func.func @transform_4(%arg0: i32) -> (i32, i32) {
    %c0_i32 = arith.constant 0 : i32
    %c0_i32_0 = arith.constant 0 : i32
    %c0_i32_1 = arith.constant 0 : i32
    return %c0_i32, %c0_i32_0 : i32, i32
  }
  func.func @transform_5(%arg0: i32) -> (i32, i32) {
    %c0_i32 = arith.constant 0 : i32
    %c0_i32_0 = arith.constant 0 : i32
    %c0_i32_1 = arith.constant 0 : i32
    return %c0_i32, %c0_i32_0 : i32, i32
  }
  func.func @transform_6(%arg0: i32) -> (i32, i32) {
    %c0_i32 = arith.constant 0 : i32
    %c0_i32_0 = arith.constant 0 : i32
    return %c0_i32, %arg0 : i32, i32
  }
}

</mosaic_0001>

<llo_original>
// kernel: tpu_custom_call.1
$region0: #{tpu_custom_call.1}
  #allocation0 [shape = 'u32[]', space=smem, size = 0x4, offset = 0x4, fixed_abs, tag = 'smem constant byte address 0x4 - core index']
  #allocation1 [shape = 'u32[144,128]{1,0:T(1,128)}', space=vmem, size = 0x12000, scoped, tag = 'internal scratch']
  %s0 = inlined_call_operand.vmem [shape: f32[8,32], index: 0, kind: input, shape index: {}]
  %s1 = inlined_call_operand.vmem [shape: bf16[32,128], index: 1, kind: input, shape index: {}]
  %s2 = inlined_call_operand.vmem [shape: f32[1,128], index: 2, kind: input, shape index: {}]
  %s3 = inlined_call_operand.vmem [shape: bf16[128,64], index: 3, kind: input, shape index: {}]
  %s4 = inlined_call_operand.vmem [shape: f32[1,64], index: 4, kind: input, shape index: {}]
  %s5 = inlined_call_operand.vmem [shape: f32[1,64], index: 5, kind: input, shape index: {}]
  %s6 = inlined_call_operand.hbm [shape: f32[1,8], index: 6, kind: output, shape index: {}]
  %s7 = sld [smem:[#allocation0]]
  $region34: #{tpu_custom_call.1} parent=0
    _
  %s9 = ssub.s32 1, %s7
  %s10 = scalar_select 0, %s9, %s7
  $region1: #{tpu_custom_call.1} parent=0
    #allocation2 [shape = 'u8[512]{0}', space=vmem, size = 0x400, scoped, tag = 'output window, operand 0, single buffered']
    #allocation3 [shape = 's32[1]{0}', space=sflag, size = 0x4, scoped, tag = 'scoped memory for tpu_custom_call.1']
    %11 = vsyncpa [#allocation3], 0
    // Predicated region
    $region2: #{tpu_custom_call.1} parent=1 // pred_check
      _
    $region3: #{tpu_custom_call.1} parent=1 // pred_check_branch
      %13 = sbr.rel (0) target = $region5
    $region4: #{tpu_custom_call.1} parent=1 // pred_region
      _
    $region5: #{tpu_custom_call.1} parent=1 // pred_fallthru
      _
    // Predicated region
    $region6: #{tpu_custom_call.1} parent=1 // pred_check
      _
    $region7: #{tpu_custom_call.1} parent=1 // pred_check_branch
      %15 = sbr.rel (0) target = $region9
    $region8: #{tpu_custom_call.1} parent=1 // pred_region
      _
    $region9: #{tpu_custom_call.1} parent=1 // pred_fallthru
      _
    // Predicated region
    $region10: #{tpu_custom_call.1} parent=1 // pred_check
      _
    $region11: #{tpu_custom_call.1} parent=1 // pred_check_branch
      %17 = sbr.rel (0) target = $region13
    $region12: #{tpu_custom_call.1} parent=1 // pred_region
      _
    $region13: #{tpu_custom_call.1} parent=1 // pred_fallthru
      _
    // Predicated region
    $region14: #{tpu_custom_call.1} parent=1 // pred_check
      _
    $region15: #{tpu_custom_call.1} parent=1 // pred_check_branch
      %19 = sbr.rel (0) target = $region17
    $region16: #{tpu_custom_call.1} parent=1 // pred_region
      _
    $region17: #{tpu_custom_call.1} parent=1 // pred_fallthru
      _
    // Predicated region
    $region18: #{tpu_custom_call.1} parent=1 // pred_check
      _
    $region19: #{tpu_custom_call.1} parent=1 // pred_check_branch
      %21 = sbr.rel (0) target = $region21
    $region20: #{tpu_custom_call.1} parent=1 // pred_region
      _
    $region21: #{tpu_custom_call.1} parent=1 // pred_fallthru
      _
    // Predicated region
    $region22: #{tpu_custom_call.1} parent=1 // pred_check
      _
    $region23: #{tpu_custom_call.1} parent=1 // pred_check_branch
      %23 = sbr.rel (0) target = $region25
    $region24: #{tpu_custom_call.1} parent=1 // pred_region
      _
    $region25: #{tpu_custom_call.1} parent=1 // pred_fallthru
      _
    %v25 = vld [vmem:[%s0] sm:$0xff]
    %v26 = vpack.c.bf16 %v25, %v25
    %v27 = vld [vmem:[%s1] sm:$0xf]
    %v28 = vld [vmem:[%s1 + $0x4] sm:$0xf]
    %v29 = vld [vmem:[%s1 + $0x8] sm:$0xf]
    %v30 = vld [vmem:[%s1 + $0xc] sm:$0xf]
    %v31 = vld [vmem:[%s2] sm:$0x1]
    %v33 = vlaneseq
    %v34 = vshrl.u32 %v33, 7
    %v35 = vsub.s32 0, %v34
    %v36 = vrot.slane %v31, %v35
    %v42 = vunpack.c.l.b16 %v27
    %v43 = vunpack.c.l.b16 %v28
    %v44 = vunpack.c.l.b16 %v29
    %v45 = vunpack.c.l.b16 %v30
    %v46 = vpack.c.b16 %v43, %v42
    %v47 = vpack.c.b16 %v45, %v44
    %vm50 = vcmask 261120
    %v52 = vsel %vm50, %v26, 0
    %54 = vmatprep.subr.bf16.mxu0 0
    %55 = vmatpush1.bf16.msra.mxu0 0
    %56 = vmatprep.subr.bf16.mxu0 0
    %57 = vmatpush1.bf16.msra.mxu0 0
    %58 = vmatprep.subr.bf16.mxu0 0
    %59 = vmatpush1.bf16.msra.mxu0 0
    %60 = vmatprep.subr.bf16.mxu0 0
    %61 = vmatpush1.bf16.msra.mxu0 0
    %62 = vmatprep.subr.bf16.mxu0 0
    %63 = vmatpush1.bf16.msra.mxu0 0
    %64 = vmatprep.subr.bf16.mxu0 0
    %65 = vmatpush1.bf16.msra.mxu0 0
    %66 = vmatprep.subr.bf16.mxu0 0
    %67 = vmatpush1.bf16.msra.mxu0 %v47
    %68 = vmatprep.subr.bf16.mxu0 0
    %69 = vmatpush1.bf16.msra.mxu0 %v46
    %70 = vmatprep.subr.bf16.mxu0 0
    %71 = vmatpush2.bf16.msra.mxu0 0
    %72 = vmatprep.subr.bf16.mxu0 0
    %73 = vmatpush2.bf16.msra.mxu0 0
    %74 = vmatprep.subr.bf16.mxu0 0
    %75 = vmatpush2.bf16.msra.mxu0 0
    %76 = vmatprep.subr.bf16.mxu0 0
    %77 = vmatpush2.bf16.msra.mxu0 0
    %78 = vmatprep.subr.bf16.mxu0 0
    %79 = vmatpush2.bf16.msra.mxu0 0
    %80 = vmatprep.subr.bf16.mxu0 0
    %81 = vmatpush2.bf16.msra.mxu0 0
    %82 = vmatprep.subr.bf16.mxu0 0
    %83 = vmatpush2.bf16.msra.mxu0 0
    %84 = vmatprep.subr.bf16.mxu0 0
    %85 = vmatpush2.bf16.msra.mxu0 0
    %86 = vmatprep.mubr.bf16.mxu0 0
    %87 = vmatmul.mubr.bf16.gmra.mxu0 %v52
    %v88 = vpop.f32.mrf.mxu0
    %v89 = vadd.f32 %v36, %v88
    %v90 = vpop.f32.mrf.mxu0
    %v91 = vpop.f32.mrf.mxu0
    %v92 = vpop.f32.mrf.mxu0
    %93 = vdwg.mxu0
    %v94 = vmax.f32 %v89, 0.0
    %v95 = vpack.c.bf16 %v94, %v94
    %v96 = vld [vmem:[%s3] sm:$0xf]
    %v97 = vld [vmem:[%s3 + $0x4] sm:$0xf]
    %v98 = vld [vmem:[%s3 + $0x8] sm:$0xf]
    %v99 = vld [vmem:[%s3 + $0xc] sm:$0xf]
    %v100 = vld [vmem:[%s3 + $0x10] sm:$0xf]
    %v101 = vld [vmem:[%s3 + $0x14] sm:$0xf]
    %v102 = vld [vmem:[%s3 + $0x18] sm:$0xf]
    %v103 = vld [vmem:[%s3 + $0x1c] sm:$0xf]
    %v104 = vld [vmem:[%s3 + $0x20] sm:$0xf]
    %v105 = vld [vmem:[%s3 + $0x24] sm:$0xf]
    %v106 = vld [vmem:[%s3 + $0x28] sm:$0xf]
    %v107 = vld [vmem:[%s3 + $0x2c] sm:$0xf]
    %v108 = vld [vmem:[%s3 + $0x30] sm:$0xf]
    %v109 = vld [vmem:[%s3 + $0x34] sm:$0xf]
    %v110 = vld [vmem:[%s3 + $0x38] sm:$0xf]
    %v111 = vld [vmem:[%s3 + $0x3c] sm:$0xf]
    %v112 = vld [vmem:[%s4] sm:$0x1]
    %v114 = vlaneseq
    %v115 = vshrl.u32 %v114, 7
    %v116 = vsub.s32 0, %v115
    %v117 = vrot.slane %v112, %v116
    %v135 = vunpack.c.l.b16 %v96
    %v136 = vunpack.c.l.b16 %v97
    %v137 = vunpack.c.l.b16 %v98
    %v138 = vunpack.c.l.b16 %v99
    %v139 = vunpack.c.l.b16 %v100
    %v140 = vunpack.c.l.b16 %v101
    %v141 = vunpack.c.l.b16 %v102
    %v142 = vunpack.c.l.b16 %v103
    %v143 = vunpack.c.l.b16 %v104
    %v144 = vunpack.c.l.b16 %v105
    %v145 = vunpack.c.l.b16 %v106
    %v146 = vunpack.c.l.b16 %v107
    %v147 = vunpack.c.l.b16 %v108
    %v148 = vunpack.c.l.b16 %v109
    %v149 = vunpack.c.l.b16 %v110
    %v150 = vunpack.c.l.b16 %v111
    %v151 = vpack.c.b16 %v136, %v135
    %v152 = vpack.c.b16 %v138, %v137
    %v153 = vpack.c.b16 %v140, %v139
    %v154 = vpack.c.b16 %v142, %v141
    %v155 = vpack.c.b16 %v144, %v143
    %v156 = vpack.c.b16 %v146, %v145
    %v157 = vpack.c.b16 %v148, %v147
    %v158 = vpack.c.b16 %v150, %v149
    %167 = vmatprep.subr.bf16.mxu0 0
    %168 = vmatpush1.bf16.msra.mxu0 %v158
    %169 = vmatprep.subr.bf16.mxu0 0
    %170 = vmatpush1.bf16.msra.mxu0 %v157
    %171 = vmatprep.subr.bf16.mxu0 0
    %172 = vmatpush1.bf16.msra.mxu0 %v156
    %173 = vmatprep.subr.bf16.mxu0 0
    %174 = vmatpush1.bf16.msra.mxu0 %v155
    %175 = vmatprep.subr.bf16.mxu0 0
    %176 = vmatpush1.bf16.msra.mxu0 %v154
    %177 = vmatprep.subr.bf16.mxu0 0
    %178 = vmatpush1.bf16.msra.mxu0 %v153
    %179 = vmatprep.subr.bf16.mxu0 0
    %180 = vmatpush1.bf16.msra.mxu0 %v152
    %181 = vmatprep.subr.bf16.mxu0 0
    %182 = vmatpush1.bf16.msra.mxu0 %v151
    %183 = vmatprep.subr.bf16.mxu0 0
    %184 = vmatpush2.bf16.msra.mxu0 0
    %185 = vmatprep.subr.bf16.mxu0 0
    %186 = vmatpush2.bf16.msra.mxu0 0
    %187 = vmatprep.subr.bf16.mxu0 0
    %188 = vmatpush2.bf16.msra.mxu0 0
    %189 = vmatprep.subr.bf16.mxu0 0
    %190 = vmatpush2.bf16.msra.mxu0 0
    %191 = vmatprep.subr.bf16.mxu0 0
    %192 = vmatpush2.bf16.msra.mxu0 0
    %193 = vmatprep.subr.bf16.mxu0 0
    %194 = vmatpush2.bf16.msra.mxu0 0
    %195 = vmatprep.subr.bf16.mxu0 0
    %196 = vmatpush2.bf16.msra.mxu0 0
    %197 = vmatprep.subr.bf16.mxu0 0
    %198 = vmatpush2.bf16.msra.mxu0 0
    %199 = vmatprep.mubr.bf16.mxu0 0
    %200 = vmatmul.mubr.bf16.gmra.mxu0 %v95
    %v201 = vpop.f32.mrf.mxu0
    %v202 = vadd.f32 %v117, %v201
    %v203 = vpop.f32.mrf.mxu0
    %v204 = vpop.f32.mrf.mxu0
    %v205 = vpop.f32.mrf.mxu0
    %206 = vdwg.mxu0
    %v207 = vmax.f32 %v202, 0.0
    %v208 = vld [vmem:[%s5] sm:$0x1]
    %vm209 = vcmask 523264
    %v211 = vsel %vm209, %v208, 0
    %v214 = vsel %vm209, %v207, 0
    %216 = vmatprep.subr.mxu0 0.0
    %217 = vmatpush1.xpose.msra.mxu0 0.0
    %218 = vmatprep.subr.mxu0 0.0
    %219 = vmatpush1.xpose.msra.mxu0 0.0
    %220 = vmatprep.subr.mxu0 0.0
    %221 = vmatpush1.xpose.msra.mxu0 0.0
    %222 = vmatprep.subr.mxu0 0.0
    %223 = vmatpush1.xpose.msra.mxu0 0.0
    %224 = vmatprep.subr.mxu0 0.0
    %225 = vmatpush1.xpose.msra.mxu0 0.0
    %226 = vmatprep.subr.mxu0 0.0
    %227 = vmatpush1.xpose.msra.mxu0 0.0
    %228 = vmatprep.subr.mxu0 0.0
    %229 = vmatpush1.xpose.msra.mxu0 0.0
    %230 = vmatprep.subr.mxu0 0.0
    %231 = vmatpush1.xpose.msra.mxu0 0.0
    %232 = vmatprep.subr.mxu0 0.0
    %233 = vmatpush1.xpose.msra.mxu0 0.0
    %234 = vmatprep.subr.mxu0 0.0
    %235 = vmatpush1.xpose.msra.mxu0 0.0
    %236 = vmatprep.subr.mxu0 0.0
    %237 = vmatpush1.xpose.msra.mxu0 0.0
    %238 = vmatprep.subr.mxu0 0.0
    %239 = vmatpush1.xpose.msra.mxu0 0.0
    %240 = vmatprep.subr.mxu0 0.0
    %241 = vmatpush1.xpose.msra.mxu0 0.0
    %242 = vmatprep.subr.mxu0 0.0
    %243 = vmatpush1.xpose.msra.mxu0 0.0
    %244 = vmatprep.subr.mxu0 0.0
    %245 = vmatpush1.xpose.msra.mxu0 0.0
    %246 = vmatprep.subr.mxu0 0.0
    %247 = vmatpush1.xpose.msra.mxu0 %v214
    %248 = vmatprep.subr.mxu0 0.0
    %249 = vmatpush2.xpose.msra.mxu0 0.0
    %250 = vmatprep.subr.mxu0 0.0
    %251 = vmatpush2.xpose.msra.mxu0 0.0
    %252 = vmatprep.subr.mxu0 0.0
    %253 = vmatpush2.xpose.msra.mxu0 0.0
    %254 = vmatprep.subr.mxu0 0.0
    %255 = vmatpush2.xpose.msra.mxu0 0.0
    %256 = vmatprep.subr.mxu0 0.0
    %257 = vmatpush2.xpose.msra.mxu0 0.0
    %258 = vmatprep.subr.mxu0 0.0
    %259 = vmatpush2.xpose.msra.mxu0 0.0
    %260 = vmatprep.subr.mxu0 0.0
    %261 = vmatpush2.xpose.msra.mxu0 0.0
    %262 = vmatprep.subr.mxu0 0.0
    %263 = vmatpush2.xpose.msra.mxu0 0.0
    %264 = vmatprep.subr.mxu0 0.0
    %265 = vmatpush2.xpose.msra.mxu0 0.0
    %266 = vmatprep.subr.mxu0 0.0
    %267 = vmatpush2.xpose.msra.mxu0 0.0
    %268 = vmatprep.subr.mxu0 0.0
    %269 = vmatpush2.xpose.msra.mxu0 0.0
    %270 = vmatprep.subr.mxu0 0.0
    %271 = vmatpush2.xpose.msra.mxu0 0.0
    %272 = vmatprep.subr.mxu0 0.0
    %273 = vmatpush2.xpose.msra.mxu0 0.0
    %274 = vmatprep.subr.mxu0 0.0
    %275 = vmatpush2.xpose.msra.mxu0 0.0
    %276 = vmatprep.subr.mxu0 0.0
    %277 = vmatpush2.xpose.msra.mxu0 0.0
    %278 = vmatprep.subr.mxu0 0.0
    %279 = vmatpush2.xpose.msra.mxu0 0.0
    %280 = vmatprep.mubr.f32.mxu0 0.0
    %281 = vmatmul.mubr.f32.gmra.mxu0 %v211
    %v282 = vpop.f32.mrf.mxu0
    %v283 = vadd.f32 0.0, %v282
    %v284 = vpop.f32.mrf.mxu0
    %285 = vdwg.mxu0
    %vm286 = vcmask 57344
    %287 = vst.msk [vmem:[#allocation2] sm:$0x1] %vm286, %v283
    // Predicated region
    $region26: #{tpu_custom_call.1} parent=1 // pred_check
      _
    $region27: #{tpu_custom_call.1} parent=1 // pred_check_branch
      %289 = sbr.rel (0) target = $region29
    $region28: #{tpu_custom_call.1} parent=1 // pred_region
      %s291 = ssub.s32 16, 16
      %292 = vsyncadd [#allocation3], %s291
      %s294 = sshll.u32 [#allocation2], 4
      %s295 = int_to_ptr.vmem [resolvable:$true] %s294
      %297 = dma.vmem_to_hbm [thread:$0]  %s295, 16, %s6, [#allocation3]
    $region29: #{tpu_custom_call.1} parent=1 // pred_fallthru
      _
    // Predicated region
    $region30: #{tpu_custom_call.1} parent=1 // pred_check
      _
    $region31: #{tpu_custom_call.1} parent=1 // pred_check_branch
      %299 = sbr.rel (0) target = $region33
    $region32: #{tpu_custom_call.1} parent=1 // pred_region
      %300 = dma.done [#allocation3], 16
    $region33: #{tpu_custom_call.1} parent=1 // pred_fallthru
      _
    %301 = vsyncpa [#allocation3], 1

</llo_original>
